<compile_context>
chip_gen: v6e
topology: v6e:2x2x1
jax: 0.10.0
libtpu: 0.0.40
codegen_flags: <defaults>
</compile_context>

<pallas_src>
import functools

import jax
import jax.numpy as jnp
from jax import lax
from jax.experimental import pallas as pl
from jax.experimental.pallas import tpu as pltpu


def _ease_kernel(x_ref, u_ref, o_ref, acc_ref, *, xent, logits):
    j = pl.program_id(1)          # output-column tile
    k = pl.program_id(2)          # reduction tile
    tk, tn = u_ref.shape

    @pl.when(k == 0)
    def _():
        acc_ref[...] = jnp.zeros_like(acc_ref)

    # Does this (tk, tn) U tile intersect the global diagonal?
    intersects = jnp.logical_and(k * tk < (j + 1) * tn,
                                 j * tn < (k + 1) * tk)

    @pl.when(intersects)
    def _():
        # Zero the diagonal of this tile (fill_diagonal_(0.0)) using global
        # row/col indices; only paid on the few tiles touching the diagonal.
        row = lax.broadcasted_iota(jnp.int32, (tk, tn), 0) + k * tk
        col = lax.broadcasted_iota(jnp.int32, (tk, tn), 1) + j * tn
        u_tile = jnp.where(row == col, jnp.zeros((), u_ref.dtype), u_ref[...])
        acc_ref[...] += jnp.dot(x_ref[...], u_tile,
                                preferred_element_type=jnp.float32)

    @pl.when(jnp.logical_not(intersects))
    def _():
        acc_ref[...] += jnp.dot(x_ref[...], u_ref[...],
                                preferred_element_type=jnp.float32)

    @pl.when(k == pl.num_programs(2) - 1)
    def _():
        y = acc_ref[...]
        if xent:
            y = y - 4.0
            if not logits:
                y = jax.nn.sigmoid(y)
        o_ref[...] = y.astype(o_ref.dtype)


def _largest_divisor_tile(dim, candidates):
    for c in candidates:
        if c <= dim and dim % c == 0:
            return c
    return dim  # fall back to full dim (always a legal block shape)


def _select_tiles(B, K, N, itemsize):
    """Pick large tiles that fit comfortably in scoped VMEM on all chips."""
    tm = _largest_divisor_tile(B, (512, 256, 128, 64, 32, 16, 8))
    tn = _largest_divisor_tile(N, (512, 384, 256, 128))
    tk = _largest_divisor_tile(K, (1024, 768, 512, 384, 256, 128))

    budget = 24 * 1024 * 1024  # conservative: safe even on v7x (64 MiB VMEM)

    def vmem_bytes(tm_, tn_, tk_):
        # double-buffered X, U, out blocks + f32 accumulator scratch
        return 2 * (tm_ * tk_ + tk_ * tn_ + tm_ * tn_) * itemsize + tm_ * tn_ * 4

    while (vmem_bytes(tm, tn, tk) > budget and tk > 256
           and (tk // 2) % 128 == 0 and K % (tk // 2) == 0):
        tk //= 2
    while (vmem_bytes(tm, tn, tk) > budget and tn > 256
           and (tn // 2) % 128 == 0 and N % (tn // 2) == 0):
        tn //= 2

    # v7x has 2 TensorCores: keep at least 2 parallel grid steps when the
    # problem is big enough to matter (don't shrink tiny problems).
    if ((B // tm) * (N // tn) < 2 and tn >= 512
            and (tn // 2) % 128 == 0 and N % (tn // 2) == 0):
        tn //= 2

    return tm, tn, tk


def ease_forward(x, u, *, xent=False, logits=True,
                 tm=None, tn=None, tk=None, cast_to_bf16=False):
    """Pallas EASE forward: Y = X @ (U with zeroed diagonal) [+ xent ops]."""
    B, K = x.shape
    K2, N = u.shape
    assert K == K2

    if cast_to_bf16:
        # Halves U's HBM traffic and uses the bf16 MXU rate; f32 accumulation.
        x = x.astype(jnp.bfloat16)
        u = u.astype(jnp.bfloat16)

    itemsize = jnp.dtype(x.dtype).itemsize
    a_tm, a_tn, a_tk = _select_tiles(B, K, N, itemsize)
    tm = tm or a_tm
    tn = tn or a_tn
    tk = tk or a_tk
    assert B % tm == 0 and N % tn == 0 and K % tk == 0

    kernel = functools.partial(_ease_kernel, xent=xent, logits=logits)

    return pl.pallas_call(
        kernel,
        out_shape=jax.ShapeDtypeStruct((B, N), x.dtype),
        grid_spec=pltpu.PrefetchScalarGridSpec(
            num_scalar_prefetch=0,
            grid=(B // tm, N // tn, K // tk),
            in_specs=[
                pl.BlockSpec((tm, tk), lambda i, j, k: (i, k)),
                pl.BlockSpec((tk, tn), lambda i, j, k: (k, j)),
            ],
            out_specs=pl.BlockSpec((tm, tn), lambda i, j, k: (i, j)),
            scratch_shapes=[pltpu.VMEM((tm, tn), jnp.float32)],
        ),
        compiler_params=pltpu.CompilerParams(
            dimension_semantics=("parallel", "parallel", "arbitrary"),
            vmem_limit_bytes=40 * 1024 * 1024,
        ),
    )(x, u)


if __name__ == "__main__":
    # TODO(synk): torch.sparse.mm path (sparse X) is not implemented; dense only.

    # --- Test 1: module demo config (B=16, 256x256), xent logits path. ---
    n_dim, m_dim, eps, batch = 256, 256, 1.0, 16
    key = jax.random.PRNGKey(0)
    kx, ku = jax.random.split(key)
    X = jax.random.normal(kx, (batch, n_dim), dtype=jnp.float32)
    U = eps * jax.random.normal(ku, (n_dim, m_dim), dtype=jnp.float32)

    U_ref = U * (1.0 - jnp.eye(n_dim, m_dim, dtype=U.dtype))

    y = jax.block_until_ready(ease_forward(X, U, xent=True, logits=True))
    y_ref = X @ U_ref - 4.0
    assert y.shape == (batch, m_dim)
    assert jnp.allclose(y, y_ref, atol=1e-4, rtol=1e-4)

    # --- Test 2: sigmoid epilogue path (xent=True, logits=False). ---
    y2 = jax.block_until_ready(ease_forward(X, U, xent=True, logits=False))
    y2_ref = jax.nn.sigmoid(X @ U_ref - 4.0)
    assert jnp.allclose(y2, y2_ref, atol=1e-4, rtol=1e-4)

    # --- Test 3: multi-tile grid (explicit small tiles) to exercise the
    #     accumulator loop and the gated diagonal masking. ---
    n3, b3 = 512, 64
    kx3, ku3 = jax.random.split(jax.random.PRNGKey(0), 2)
    X3 = jax.random.normal(kx3, (b3, n3), dtype=jnp.float32)
    U3 = jax.random.normal(ku3, (n3, n3), dtype=jnp.float32)
    y3 = jax.block_until_ready(
        ease_forward(X3, U3, xent=False, tm=32, tn=128, tk=128))
    y3_ref = X3 @ (U3 * (1.0 - jnp.eye(n3, dtype=U3.dtype)))
    assert jnp.allclose(y3, y3_ref, atol=1e-3, rtol=1e-3)

    print("KERNEL_OK")
</pallas_src>

<mosaic_0001>
module attributes {stable_mosaic.version = 11 : i64} {
  func.func @_ease_kernel(%arg0: i32, %arg1: i32, %arg2: i32, %arg3: memref<16x256xf32, #tpu.memory_space<vmem>>, %arg4: memref<256x256xf32, #tpu.memory_space<vmem>>, %arg5: memref<16x256xf32, #tpu.memory_space<vmem>>, %arg6: memref<16x256xf32, #tpu.memory_space<vmem>>) attributes {dimension_semantics = [#tpu.dimension_semantics<parallel>, #tpu.dimension_semantics<parallel>, #tpu.dimension_semantics<arbitrary>], iteration_bounds = array<i64: 1, 1, 1>, scalar_prefetch = 0 : i64, scratch_operands = 1 : i64, tpu.core_type = #tpu.core_type<tc>, window_params = [{transform_indices = @transform_0, window_bounds = array<i64: 16, 256>}, {transform_indices = @transform_1, window_bounds = array<i64: 256, 256>}, {transform_indices = @transform_2, window_bounds = array<i64: 16, 256>}]} {
    %c0_i32 = arith.constant 0 : i32
    %0 = arith.cmpi eq, %arg2, %c0_i32 : i32
    %1 = arith.extui %0 : i1 to i32
    %c0_i32_0 = arith.constant 0 : i32
    %2 = arith.cmpi ne, %1, %c0_i32_0 : i32
    scf.if %2 {
      %cst = arith.constant 0.000000e+00 : f32
      %20 = vector.broadcast %cst : f32 to vector<16x256xf32>
      %c0 = arith.constant 0 : index
      %c0_9 = arith.constant 0 : index
      %21 = vector.load %arg6[%c0, %c0_9] : memref<16x256xf32, #tpu.memory_space<vmem>>, vector<16x256xf32>
      tpu.vector_store %arg6[%c0, %c0_9], %20 {strides = array<i32>} : memref<16x256xf32, #tpu.memory_space<vmem>>, vector<16x256xf32>,
    } else {
    }
    %c256_i32 = arith.constant 256 : i32
    %3 = arith.muli %arg2, %c256_i32 : i32
    %c1_i32 = arith.constant 1 : i32
    %4 = arith.addi %arg1, %c1_i32 : i32
    %c256_i32_1 = arith.constant 256 : i32
    %5 = arith.muli %4, %c256_i32_1 : i32
    %6 = arith.cmpi slt, %3, %5 : i32
    %c256_i32_2 = arith.constant 256 : i32
    %7 = arith.muli %arg1, %c256_i32_2 : i32
    %c1_i32_3 = arith.constant 1 : i32
    %8 = arith.addi %arg2, %c1_i32_3 : i32
    %c256_i32_4 = arith.constant 256 : i32
    %9 = arith.muli %8, %c256_i32_4 : i32
    %10 = arith.cmpi slt, %7, %9 : i32
    %11 = arith.andi %6, %10 : i1
    %12 = arith.extui %11 : i1 to i32
    %c0_i32_5 = arith.constant 0 : i32
    %13 = arith.cmpi ne, %12, %c0_i32_5 : i32
    scf.if %13 {
      %20 = tpu.iota {dimensions = array<i32: 0>} : vector<256x256xi32>
      %c256_i32_9 = arith.constant 256 : i32
      %21 = arith.muli %arg2, %c256_i32_9 : i32
      %22 = vector.broadcast %21 : i32 to vector<256x256xi32>
      %23 = arith.addi %20, %22 : vector<256x256xi32>
      %24 = tpu.iota {dimensions = array<i32: 1>} : vector<256x256xi32>
      %c256_i32_10 = arith.constant 256 : i32
      %25 = arith.muli %arg1, %c256_i32_10 : i32
      %26 = vector.broadcast %25 : i32 to vector<256x256xi32>
      %27 = arith.addi %24, %26 : vector<256x256xi32>
      %28 = arith.cmpi eq, %23, %27 : vector<256x256xi32>
      %c0 = arith.constant 0 : index
      %c0_11 = arith.constant 0 : index
      %29 = vector.load %arg4[%c0, %c0_11] : memref<256x256xf32, #tpu.memory_space<vmem>>, vector<256x256xf32>
      %cst = arith.constant 0.000000e+00 : f32
      %30 = vector.broadcast %cst : f32 to vector<256x256xf32>
      %31 = arith.select %28, %30, %29 : vector<256x256xi1>, vector<256x256xf32>
      %c0_12 = arith.constant 0 : index
      %c0_13 = arith.constant 0 : index
      %32 = vector.load %arg6[%c0_12, %c0_13] : memref<16x256xf32, #tpu.memory_space<vmem>>, vector<16x256xf32>
      %c0_14 = arith.constant 0 : index
      %c0_15 = arith.constant 0 : index
      %33 = vector.load %arg3[%c0_14, %c0_15] : memref<16x256xf32, #tpu.memory_space<vmem>>, vector<16x256xf32>
      %cst_16 = arith.constant dense<0.000000e+00> : vector<16x256xf32>
      %34 = tpu.matmul %33, %31, %cst_16 {dimension_numbers = #tpu.dot_dimension_numbers<[1], [0], [0], [1], [0, 0, 1, 1], [], []>} : vector<16x256xf32>, vector<256x256xf32>, vector<16x256xf32> -> vector<16x256xf32>
      %35 = arith.addf %32, %34 : vector<16x256xf32>
      %c0_17 = arith.constant 0 : index
      %c0_18 = arith.constant 0 : index
      %36 = vector.load %arg6[%c0_17, %c0_18] : memref<16x256xf32, #tpu.memory_space<vmem>>, vector<16x256xf32>
      tpu.vector_store %arg6[%c0_17, %c0_18], %35 {strides = array<i32>} : memref<16x256xf32, #tpu.memory_space<vmem>>, vector<16x256xf32>,
    } else {
    }
    %true = arith.constant true
    %14 = arith.xori %11, %true : i1
    %15 = arith.extui %14 : i1 to i32
    %c0_i32_6 = arith.constant 0 : i32
    %16 = arith.cmpi ne, %15, %c0_i32_6 : i32
    scf.if %16 {
      %c0 = arith.constant 0 : index
      %c0_9 = arith.constant 0 : index
      %20 = vector.load %arg6[%c0, %c0_9] : memref<16x256xf32, #tpu.memory_space<vmem>>, vector<16x256xf32>
      %c0_10 = arith.constant 0 : index
      %c0_11 = arith.constant 0 : index
      %21 = vector.load %arg3[%c0_10, %c0_11] : memref<16x256xf32, #tpu.memory_space<vmem>>, vector<16x256xf32>
      %c0_12 = arith.constant 0 : index
      %c0_13 = arith.constant 0 : index
      %22 = vector.load %arg4[%c0_12, %c0_13] : memref<256x256xf32, #tpu.memory_space<vmem>>, vector<256x256xf32>
      %cst = arith.constant dense<0.000000e+00> : vector<16x256xf32>
      %23 = tpu.matmul %21, %22, %cst {dimension_numbers = #tpu.dot_dimension_numbers<[1], [0], [0], [1], [0, 0, 1, 1], [], []>} : vector<16x256xf32>, vector<256x256xf32>, vector<16x256xf32> -> vector<16x256xf32>
      %24 = arith.addf %20, %23 : vector<16x256xf32>
      %c0_14 = arith.constant 0 : index
      %c0_15 = arith.constant 0 : index
      %25 = vector.load %arg6[%c0_14, %c0_15] : memref<16x256xf32, #tpu.memory_space<vmem>>, vector<16x256xf32>
      tpu.vector_store %arg6[%c0_14, %c0_15], %24 {strides = array<i32>} : memref<16x256xf32, #tpu.memory_space<vmem>>, vector<16x256xf32>,
    } else {
    }
    %c0_i32_7 = arith.constant 0 : i32
    %17 = arith.cmpi eq, %arg2, %c0_i32_7 : i32
    %18 = arith.extui %17 : i1 to i32
    %c0_i32_8 = arith.constant 0 : i32
    %19 = arith.cmpi ne, %18, %c0_i32_8 : i32
    scf.if %19 {
      %c0 = arith.constant 0 : index
      %c0_9 = arith.constant 0 : index
      %20 = vector.load %arg6[%c0, %c0_9] : memref<16x256xf32, #tpu.memory_space<vmem>>, vector<16x256xf32>
      %cst = arith.constant 4.000000e+00 : f32
      %21 = vector.broadcast %cst : f32 to vector<16x256xf32>
      %22 = arith.subf %20, %21 : vector<16x256xf32>
      %c0_10 = arith.constant 0 : index
      %c0_11 = arith.constant 0 : index
      %23 = vector.load %arg5[%c0_10, %c0_11] : memref<16x256xf32, #tpu.memory_space<vmem>>, vector<16x256xf32>
      tpu.vector_store %arg5[%c0_10, %c0_11], %22 {strides = array<i32>} : memref<16x256xf32, #tpu.memory_space<vmem>>, vector<16x256xf32>,
    } else {
    }
    return
  }
  func.func @transform_0(%arg0: i32, %arg1: i32, %arg2: i32) -> (i32, i32) {
    %c0_i32 = arith.constant 0 : i32
    return %arg0, %arg2 : i32, i32
  }
  func.func @transform_1(%arg0: i32, %arg1: i32, %arg2: i32) -> (i32, i32) {
    %c0_i32 = arith.constant 0 : i32
    return %arg2, %arg1 : i32, i32
  }
  func.func @transform_2(%arg0: i32, %arg1: i32, %arg2: i32) -> (i32, i32) {
    %c0_i32 = arith.constant 0 : i32
    return %arg0, %arg1 : i32, i32
  }
}

</mosaic_0001>

<llo_original>
// kernel: tpu_custom_call.1
$region0: #{tpu_custom_call.1}
  #allocation0 [shape = 'u32[]', space=smem, size = 0x4, offset = 0x4, fixed_abs, tag = 'smem constant byte address 0x4 - core index']
  #allocation1 [shape = 'u32[144,128]{1,0:T(1,128)}', space=vmem, size = 0x12000, scoped, tag = 'internal scratch']
  #allocation2 [shape = 'f32[16,256]{1,0:T(8,128)}', space=vmem, size = 0x4000, scoped, tag = 'scratch operand']
  %s0 = inlined_call_operand.hbm [shape: f32[16,256], index: 0, kind: input, shape index: {}]
  %s1 = inlined_call_operand.hbm [shape: f32[256,256], index: 1, kind: input, shape index: {}]
  %s2 = inlined_call_operand.hbm [shape: f32[16,256], index: 2, kind: output, shape index: {}]
  %s3 = sld [smem:[#allocation0]]
  $region42: #{tpu_custom_call.1} parent=0
    _
  %s5 = ssub.s32 1, %s3
  %s6 = scalar_select 0, %s5, %s3
  $region1: #{tpu_custom_call.1} parent=0
    #allocation3 [shape = 'u8[16384]{0}', space=vmem, size = 0x4000, scoped, tag = 'input window, operand 0, single buffered']
    #allocation4 [shape = 's32[1]{0}', space=sflag, size = 0x4, scoped, tag = 'scoped memory for tpu_custom_call.1']
    #allocation5 [shape = 's32[1]{0}', space=sflag, size = 0x4, scoped, tag = 'scoped memory for tpu_custom_call.1']
    #allocation6 [shape = 'u8[262144]{0}', space=vmem, size = 0x40000, scoped, tag = 'input window, operand 1, single buffered']
    #allocation7 [shape = 's32[1]{0}', space=sflag, size = 0x4, scoped, tag = 'scoped memory for tpu_custom_call.1']
    #allocation8 [shape = 'u8[16384]{0}', space=vmem, size = 0x4000, scoped, tag = 'output window, operand 0, single buffered']
    %7 = vsyncpa [#allocation4], 0
    %8 = vsyncpa [#allocation7], 0
    %9 = vsyncpa [#allocation5], 0
    // Predicated region
    $region2: #{tpu_custom_call.1} parent=1 // pred_check
      _
    $region3: #{tpu_custom_call.1} parent=1 // pred_check_branch
      %11 = sbr.rel (0) target = $region5
    $region4: #{tpu_custom_call.1} parent=1 // pred_region
      %s13 = ssub.s32 512, 512
      %14 = vsyncadd [#allocation4], %s13
      %s15 = sshll.u32 [#allocation3], 4
      %s16 = int_to_ptr.vmem [resolvable:$true] %s15
      %21 = dma.hbm_to_vmem [thread:$0]  %s0, 512, %s16, [#allocation4], 256, 256, 16
    $region5: #{tpu_custom_call.1} parent=1 // pred_fallthru
      _
    // Predicated region
    $region6: #{tpu_custom_call.1} parent=1 // pred_check
      _
    $region7: #{tpu_custom_call.1} parent=1 // pred_check_branch
      %23 = sbr.rel (0) target = $region9
    $region8: #{tpu_custom_call.1} parent=1 // pred_region
      %s25 = ssub.s32 8192, 8192
      %26 = vsyncadd [#allocation7], %s25
      %s27 = sshll.u32 [#allocation6], 4
      %s28 = int_to_ptr.vmem [resolvable:$true] %s27
      %33 = dma.hbm_to_vmem [thread:$0]  %s1, 8192, %s28, [#allocation7], 256, 256, 16
    $region9: #{tpu_custom_call.1} parent=1 // pred_fallthru
      _
    // Predicated region
    $region10: #{tpu_custom_call.1} parent=1 // pred_check
      _
    $region11: #{tpu_custom_call.1} parent=1 // pred_check_branch
      %35 = sbr.rel (0) target = $region13
    $region12: #{tpu_custom_call.1} parent=1 // pred_region
      %36 = dma.done [#allocation4], 512
    $region13: #{tpu_custom_call.1} parent=1 // pred_fallthru
      _
    // Predicated region
    $region14: #{tpu_custom_call.1} parent=1 // pred_check
      _
    $region15: #{tpu_custom_call.1} parent=1 // pred_check_branch
      %38 = sbr.rel (0) target = $region17
    $region16: #{tpu_custom_call.1} parent=1 // pred_region
      %39 = dma.done [#allocation7], 8192
    $region17: #{tpu_custom_call.1} parent=1 // pred_fallthru
      _
    %p40 = scmp.eq.s32.totalorder 0, 0
    // Predicated region
    $region18: #{tpu_custom_call.1} parent=1 // pred_check
      %p41 = pneg %p40
    $region19: #{tpu_custom_call.1} parent=1 // pred_check_branch
      %43 = sbr.rel (%p41) target = $region21
    $region20: #{tpu_custom_call.1} parent=1 // pred_region
      %44 = vst [vmem:[#allocation2] sm:$0xff] 0.0
      %45 = vst [vmem:[#allocation2 + $0x8] sm:$0xff] 0.0
      %46 = vst [vmem:[#allocation2 + $0x10] sm:$0xff] 0.0
      %47 = vst [vmem:[#allocation2 + $0x18] sm:$0xff] 0.0
    $region21: #{tpu_custom_call.1} parent=1 // pred_fallthru
      _
    %s48 = smul.u32 0, 256
    %s49 = sadd.s32 0, 1
    %s50 = smul.u32 %s49, 256
    %p51 = scmp.lt.s32.totalorder %s48, %s50
    %s52 = smul.u32 0, 256
    %s53 = sadd.s32 0, 1
    %s54 = smul.u32 %s53, 256
    %p55 = scmp.lt.s32.totalorder %s52, %s54
    %p56 = pnand %p51, %p55
    %p57 = pneg %p56
    // Predicated region
    $region22: #{tpu_custom_call.1} parent=1 // pred_check
      _
    $region23: #{tpu_custom_call.1} parent=1 // pred_check_branch
      %59 = sbr.rel (%p56) target = $region25
    $region24: #{tpu_custom_call.1} parent=1 // pred_region
      %v60 = vlaneseq
      %v61 = vshrl.u32 %v60, 7
      %v62 = vadd.s32 %v61, 8
      %v63 = vadd.s32 %v61, 16
      %v64 = vadd.s32 %v61, 24
      %v65 = vadd.s32 %v61, 32
      %v66 = vadd.s32 %v61, 40
      %v67 = vadd.s32 %v61, 48
      %v68 = vadd.s32 %v61, 56
      %v69 = vadd.s32 %v61, 64
      %v70 = vadd.s32 %v61, 72
      %v71 = vadd.s32 %v61, 80
      %v72 = vadd.s32 %v61, 88
      %v73 = vadd.s32 %v61, 96
      %v74 = vadd.s32 %v61, 104
      %v75 = vadd.s32 %v61, 112
      %v76 = vadd.s32 %v61, 120
      %v77 = vadd.s32 %v61, 128
      %v78 = vadd.s32 %v61, 136
      %v79 = vadd.s32 %v61, 144
      %v80 = vadd.s32 %v61, 152
      %v81 = vadd.s32 %v61, 160
      %v82 = vadd.s32 %v61, 168
      %v83 = vadd.s32 %v61, 176
      %v84 = vadd.s32 %v61, 184
      %v85 = vadd.s32 %v61, 192
      %v86 = vadd.s32 %v61, 200
      %v87 = vadd.s32 %v61, 208
      %v88 = vadd.s32 %v61, 216
      %v89 = vadd.s32 %v61, 224
      %v90 = vadd.s32 %v61, 232
      %v91 = vadd.s32 %v61, 240
      %v92 = vadd.s32 %v61, 248
      %v93 = vstv %s48
      %v94 = vadd.s32 %v61, %v93
      %v95 = vadd.s32 %v62, %v93
      %v96 = vadd.s32 %v63, %v93
      %v97 = vadd.s32 %v64, %v93
      %v98 = vadd.s32 %v65, %v93
      %v99 = vadd.s32 %v66, %v93
      %v100 = vadd.s32 %v67, %v93
      %v101 = vadd.s32 %v68, %v93
      %v102 = vadd.s32 %v69, %v93
      %v103 = vadd.s32 %v70, %v93
      %v104 = vadd.s32 %v71, %v93
      %v105 = vadd.s32 %v72, %v93
      %v106 = vadd.s32 %v73, %v93
      %v107 = vadd.s32 %v74, %v93
      %v108 = vadd.s32 %v75, %v93
      %v109 = vadd.s32 %v76, %v93
      %v110 = vadd.s32 %v77, %v93
      %v111 = vadd.s32 %v78, %v93
      %v112 = vadd.s32 %v79, %v93
      %v113 = vadd.s32 %v80, %v93
      %v114 = vadd.s32 %v81, %v93
      %v115 = vadd.s32 %v82, %v93
      %v116 = vadd.s32 %v83, %v93
      %v117 = vadd.s32 %v84, %v93
      %v118 = vadd.s32 %v85, %v93
      %v119 = vadd.s32 %v86, %v93
      %v120 = vadd.s32 %v87, %v93
      %v121 = vadd.s32 %v88, %v93
      %v122 = vadd.s32 %v89, %v93
      %v123 = vadd.s32 %v90, %v93
      %v124 = vadd.s32 %v91, %v93
      %v125 = vadd.s32 %v92, %v93
      %v126 = vlaneseq
      %v127 = vand.u32 %v126, 127
      %v128 = vadd.s32 %v127, 128
      %v129 = vstv %s52
      %v130 = vadd.s32 %v127, %v129
      %v131 = vadd.s32 %v128, %v129
      %vm132 = vcmp.eq.s32.totalorder %v94, %v130
      %vm133 = vcmp.eq.s32.totalorder %v94, %v131
      %vm134 = vcmp.eq.s32.totalorder %v95, %v130
      %vm135 = vcmp.eq.s32.totalorder %v95, %v131
      %vm136 = vcmp.eq.s32.totalorder %v96, %v130
      %vm137 = vcmp.eq.s32.totalorder %v96, %v131
      %vm138 = vcmp.eq.s32.totalorder %v97, %v130
      %vm139 = vcmp.eq.s32.totalorder %v97, %v131
      %vm140 = vcmp.eq.s32.totalorder %v98, %v130
      %vm141 = vcmp.eq.s32.totalorder %v98, %v131
      %vm142 = vcmp.eq.s32.totalorder %v99, %v130
      %vm143 = vcmp.eq.s32.totalorder %v99, %v131
      %vm144 = vcmp.eq.s32.totalorder %v100, %v130
      %vm145 = vcmp.eq.s32.totalorder %v100, %v131
      %vm146 = vcmp.eq.s32.totalorder %v101, %v130
      %vm147 = vcmp.eq.s32.totalorder %v101, %v131
      %vm148 = vcmp.eq.s32.totalorder %v102, %v130
      %vm149 = vcmp.eq.s32.totalorder %v102, %v131
      %vm150 = vcmp.eq.s32.totalorder %v103, %v130
      %vm151 = vcmp.eq.s32.totalorder %v103, %v131
      %vm152 = vcmp.eq.s32.totalorder %v104, %v130
      %vm153 = vcmp.eq.s32.totalorder %v104, %v131
      %vm154 = vcmp.eq.s32.totalorder %v105, %v130
      %vm155 = vcmp.eq.s32.totalorder %v105, %v131
      %vm156 = vcmp.eq.s32.totalorder %v106, %v130
      %vm157 = vcmp.eq.s32.totalorder %v106, %v131
      %vm158 = vcmp.eq.s32.totalorder %v107, %v130
      %vm159 = vcmp.eq.s32.totalorder %v107, %v131
      %vm160 = vcmp.eq.s32.totalorder %v108, %v130
      %vm161 = vcmp.eq.s32.totalorder %v108, %v131
      %vm162 = vcmp.eq.s32.totalorder %v109, %v130
      %vm163 = vcmp.eq.s32.totalorder %v109, %v131
      %vm164 = vcmp.eq.s32.totalorder %v110, %v130
      %vm165 = vcmp.eq.s32.totalorder %v110, %v131
      %vm166 = vcmp.eq.s32.totalorder %v111, %v130
      %vm167 = vcmp.eq.s32.totalorder %v111, %v131
      %vm168 = vcmp.eq.s32.totalorder %v112, %v130
      %vm169 = vcmp.eq.s32.totalorder %v112, %v131
      %vm170 = vcmp.eq.s32.totalorder %v113, %v130
      %vm171 = vcmp.eq.s32.totalorder %v113, %v131
      %vm172 = vcmp.eq.s32.totalorder %v114, %v130
      %vm173 = vcmp.eq.s32.totalorder %v114, %v131
      %vm174 = vcmp.eq.s32.totalorder %v115, %v130
      %vm175 = vcmp.eq.s32.totalorder %v115, %v131
      %vm176 = vcmp.eq.s32.totalorder %v116, %v130
      %vm177 = vcmp.eq.s32.totalorder %v116, %v131
      %vm178 = vcmp.eq.s32.totalorder %v117, %v130
      %vm179 = vcmp.eq.s32.totalorder %v117, %v131
      %vm180 = vcmp.eq.s32.totalorder %v118, %v130
      %vm181 = vcmp.eq.s32.totalorder %v118, %v131
      %vm182 = vcmp.eq.s32.totalorder %v119, %v130
      %vm183 = vcmp.eq.s32.totalorder %v119, %v131
      %vm184 = vcmp.eq.s32.totalorder %v120, %v130
      %vm185 = vcmp.eq.s32.totalorder %v120, %v131
      %vm186 = vcmp.eq.s32.totalorder %v121, %v130
      %vm187 = vcmp.eq.s32.totalorder %v121, %v131
      %vm188 = vcmp.eq.s32.totalorder %v122, %v130
      %vm189 = vcmp.eq.s32.totalorder %v122, %v131
      %vm190 = vcmp.eq.s32.totalorder %v123, %v130
      %vm191 = vcmp.eq.s32.totalorder %v123, %v131
      %vm192 = vcmp.eq.s32.totalorder %v124, %v130
      %vm193 = vcmp.eq.s32.totalorder %v124, %v131
      %vm194 = vcmp.eq.s32.totalorder %v125, %v130
      %vm195 = vcmp.eq.s32.totalorder %v125, %v131
      %v196 = vld [vmem:[#allocation6] sm:$0xff]
      %v197 = vld [vmem:[#allocation6 + $0x8] sm:$0xff]
      %v198 = vld [vmem:[#allocation6 + $0x10] sm:$0xff]
      %v199 = vld [vmem:[#allocation6 + $0x18] sm:$0xff]
      %v200 = vld [vmem:[#allocation6 + $0x20] sm:$0xff]
      %v201 = vld [vmem:[#allocation6 + $0x28] sm:$0xff]
      %v202 = vld [vmem:[#allocation6 + $0x30] sm:$0xff]
      %v203 = vld [vmem:[#allocation6 + $0x38] sm:$0xff]
      %v204 = vld [vmem:[#allocation6 + $0x40] sm:$0xff]
      %v205 = vld [vmem:[#allocation6 + $0x48] sm:$0xff]
      %v206 = vld [vmem:[#allocation6 + $0x50] sm:$0xff]
      %v207 = vld [vmem:[#allocation6 + $0x58] sm:$0xff]
      %v208 = vld [vmem:[#allocation6 + $0x60] sm:$0xff]
      %v209 = vld [vmem:[#allocation6 + $0x68] sm:$0xff]
      %v210 = vld [vmem:[#allocation6 + $0x70] sm:$0xff]
      %v211 = vld [vmem:[#allocation6 + $0x78] sm:$0xff]
      %v212 = vld [vmem:[#allocation6 + $0x80] sm:$0xff]
      %v213 = vld [vmem:[#allocation6 + $0x88] sm:$0xff]
      %v214 = vld [vmem:[#allocation6 + $0x90] sm:$0xff]
      %v215 = vld [vmem:[#allocation6 + $0x98] sm:$0xff]
      %v216 = vld [vmem:[#allocation6 + $0xa0] sm:$0xff]
      %v217 = vld [vmem:[#allocation6 + $0xa8] sm:$0xff]
      %v218 = vld [vmem:[#allocation6 + $0xb0] sm:$0xff]
      %v219 = vld [vmem:[#allocation6 + $0xb8] sm:$0xff]
      %v220 = vld [vmem:[#allocation6 + $0xc0] sm:$0xff]
      %v221 = vld [vmem:[#allocation6 + $0xc8] sm:$0xff]
      %v222 = vld [vmem:[#allocation6 + $0xd0] sm:$0xff]
      %v223 = vld [vmem:[#allocation6 + $0xd8] sm:$0xff]
      %v224 = vld [vmem:[#allocation6 + $0xe0] sm:$0xff]
      %v225 = vld [vmem:[#allocation6 + $0xe8] sm:$0xff]
      %v226 = vld [vmem:[#allocation6 + $0xf0] sm:$0xff]
      %v227 = vld [vmem:[#allocation6 + $0xf8] sm:$0xff]
      %v228 = vld [vmem:[#allocation6 + $0x100] sm:$0xff]
      %v229 = vld [vmem:[#allocation6 + $0x108] sm:$0xff]
      %v230 = vld [vmem:[#allocation6 + $0x110] sm:$0xff]
      %v231 = vld [vmem:[#allocation6 + $0x118] sm:$0xff]
      %v232 = vld [vmem:[#allocation6 + $0x120] sm:$0xff]
      %v233 = vld [vmem:[#allocation6 + $0x128] sm:$0xff]
      %v234 = vld [vmem:[#allocation6 + $0x130] sm:$0xff]
      %v235 = vld [vmem:[#allocation6 + $0x138] sm:$0xff]
      %v236 = vld [vmem:[#allocation6 + $0x140] sm:$0xff]
      %v237 = vld [vmem:[#allocation6 + $0x148] sm:$0xff]
      %v238 = vld [vmem:[#allocation6 + $0x150] sm:$0xff]
      %v239 = vld [vmem:[#allocation6 + $0x158] sm:$0xff]
      %v240 = vld [vmem:[#allocation6 + $0x160] sm:$0xff]
      %v241 = vld [vmem:[#allocation6 + $0x168] sm:$0xff]
      %v242 = vld [vmem:[#allocation6 + $0x170] sm:$0xff]
      %v243 = vld [vmem:[#allocation6 + $0x178] sm:$0xff]
      %v244 = vld [vmem:[#allocation6 + $0x180] sm:$0xff]
      %v245 = vld [vmem:[#allocation6 + $0x188] sm:$0xff]
      %v246 = vld [vmem:[#allocation6 + $0x190] sm:$0xff]
      %v247 = vld [vmem:[#allocation6 + $0x198] sm:$0xff]
      %v248 = vld [vmem:[#allocation6 + $0x1a0] sm:$0xff]
      %v249 = vld [vmem:[#allocation6 + $0x1a8] sm:$0xff]
      %v250 = vld [vmem:[#allocation6 + $0x1b0] sm:$0xff]
      %v251 = vld [vmem:[#allocation6 + $0x1b8] sm:$0xff]
      %v252 = vld [vmem:[#allocation6 + $0x1c0] sm:$0xff]
      %v253 = vld [vmem:[#allocation6 + $0x1c8] sm:$0xff]
      %v254 = vld [vmem:[#allocation6 + $0x1d0] sm:$0xff]
      %v255 = vld [vmem:[#allocation6 + $0x1d8] sm:$0xff]
      %v256 = vld [vmem:[#allocation6 + $0x1e0] sm:$0xff]
      %v257 = vld [vmem:[#allocation6 + $0x1e8] sm:$0xff]
      %v258 = vld [vmem:[#allocation6 + $0x1f0] sm:$0xff]
      %v259 = vld [vmem:[#allocation6 + $0x1f8] sm:$0xff]
      %v260 = vsel %vm132, 0.0, %v196
      %v261 = vsel %vm133, 0.0, %v197
      %v262 = vsel %vm134, 0.0, %v198
      %v263 = vsel %vm135, 0.0, %v199
      %v264 = vsel %vm136, 0.0, %v200
      %v265 = vsel %vm137, 0.0, %v201
      %v266 = vsel %vm138, 0.0, %v202
      %v267 = vsel %vm139, 0.0, %v203
      %v268 = vsel %vm140, 0.0, %v204
      %v269 = vsel %vm141, 0.0, %v205
      %v270 = vsel %vm142, 0.0, %v206
      %v271 = vsel %vm143, 0.0, %v207
      %v272 = vsel %vm144, 0.0, %v208
      %v273 = vsel %vm145, 0.0, %v209
      %v274 = vsel %vm146, 0.0, %v210
      %v275 = vsel %vm147, 0.0, %v211
      %v276 = vsel %vm148, 0.0, %v212
      %v277 = vsel %vm149, 0.0, %v213
      %v278 = vsel %vm150, 0.0, %v214
      %v279 = vsel %vm151, 0.0, %v215
      %v280 = vsel %vm152, 0.0, %v216
      %v281 = vsel %vm153, 0.0, %v217
      %v282 = vsel %vm154, 0.0, %v218
      %v283 = vsel %vm155, 0.0, %v219
      %v284 = vsel %vm156, 0.0, %v220
      %v285 = vsel %vm157, 0.0, %v221
      %v286 = vsel %vm158, 0.0, %v222
      %v287 = vsel %vm159, 0.0, %v223
      %v288 = vsel %vm160, 0.0, %v224
      %v289 = vsel %vm161, 0.0, %v225
      %v290 = vsel %vm162, 0.0, %v226
      %v291 = vsel %vm163, 0.0, %v227
      %v292 = vsel %vm164, 0.0, %v228
      %v293 = vsel %vm165, 0.0, %v229
      %v294 = vsel %vm166, 0.0, %v230
      %v295 = vsel %vm167, 0.0, %v231
      %v296 = vsel %vm168, 0.0, %v232
      %v297 = vsel %vm169, 0.0, %v233
      %v298 = vsel %vm170, 0.0, %v234
      %v299 = vsel %vm171, 0.0, %v235
      %v300 = vsel %vm172, 0.0, %v236
      %v301 = vsel %vm173, 0.0, %v237
      %v302 = vsel %vm174, 0.0, %v238
      %v303 = vsel %vm175, 0.0, %v239
      %v304 = vsel %vm176, 0.0, %v240
      %v305 = vsel %vm177, 0.0, %v241
      %v306 = vsel %vm178, 0.0, %v242
      %v307 = vsel %vm179, 0.0, %v243
      %v308 = vsel %vm180, 0.0, %v244
      %v309 = vsel %vm181, 0.0, %v245
      %v310 = vsel %vm182, 0.0, %v246
      %v311 = vsel %vm183, 0.0, %v247
      %v312 = vsel %vm184, 0.0, %v248
      %v313 = vsel %vm185, 0.0, %v249
      %v314 = vsel %vm186, 0.0, %v250
      %v315 = vsel %vm187, 0.0, %v251
      %v316 = vsel %vm188, 0.0, %v252
      %v317 = vsel %vm189, 0.0, %v253
      %v318 = vsel %vm190, 0.0, %v254
      %v319 = vsel %vm191, 0.0, %v255
      %v320 = vsel %vm192, 0.0, %v256
      %v321 = vsel %vm193, 0.0, %v257
      %v322 = vsel %vm194, 0.0, %v258
      %v323 = vsel %vm195, 0.0, %v259
      %v324 = vld [vmem:[#allocation2] sm:$0xff]
      %v325 = vld [vmem:[#allocation2 + $0x8] sm:$0xff]
      %v326 = vld [vmem:[#allocation2 + $0x10] sm:$0xff]
      %v327 = vld [vmem:[#allocation2 + $0x18] sm:$0xff]
      %v328 = vld [vmem:[#allocation3] sm:$0xff]
      %v329 = vld [vmem:[#allocation3 + $0x8] sm:$0xff]
      %v330 = vld [vmem:[#allocation3 + $0x10] sm:$0xff]
      %v331 = vld [vmem:[#allocation3 + $0x18] sm:$0xff]
      %332 = vmatprep.subr.mxu0 %v291
      %333 = vmatpush1.msra.mxu0 %v290
      %334 = vmatprep.subr.mxu0 %v289
      %335 = vmatpush1.msra.mxu0 %v288
      %336 = vmatprep.subr.mxu0 %v287
      %337 = vmatpush1.msra.mxu0 %v286
      %338 = vmatprep.subr.mxu0 %v285
      %339 = vmatpush1.msra.mxu0 %v284
      %340 = vmatprep.subr.mxu0 %v283
      %341 = vmatpush1.msra.mxu0 %v282
      %342 = vmatprep.subr.mxu0 %v281
      %343 = vmatpush1.msra.mxu0 %v280
      %344 = vmatprep.subr.mxu0 %v279
      %345 = vmatpush1.msra.mxu0 %v278
      %346 = vmatprep.subr.mxu0 %v277
      %347 = vmatpush1.msra.mxu0 %v276
      %348 = vmatprep.subr.mxu0 %v275
      %349 = vmatpush1.msra.mxu0 %v274
      %350 = vmatprep.subr.mxu0 %v273
      %351 = vmatpush1.msra.mxu0 %v272
      %352 = vmatprep.subr.mxu0 %v271
      %353 = vmatpush1.msra.mxu0 %v270
      %354 = vmatprep.subr.mxu0 %v269
      %355 = vmatpush1.msra.mxu0 %v268
      %356 = vmatprep.subr.mxu0 %v267
      %357 = vmatpush1.msra.mxu0 %v266
      %358 = vmatprep.subr.mxu0 %v265
      %359 = vmatpush1.msra.mxu0 %v264
      %360 = vmatprep.subr.mxu0 %v263
      %361 = vmatpush1.msra.mxu0 %v262
      %362 = vmatprep.subr.mxu0 %v261
      %363 = vmatpush1.msra.mxu0 %v260
      %364 = vmatprep.subr.mxu0 %v323
      %365 = vmatpush2.msra.mxu0 %v322
      %366 = vmatprep.subr.mxu0 %v321
      %367 = vmatpush2.msra.mxu0 %v320
      %368 = vmatprep.subr.mxu0 %v319
      %369 = vmatpush2.msra.mxu0 %v318
      %370 = vmatprep.subr.mxu0 %v317
      %371 = vmatpush2.msra.mxu0 %v316
      %372 = vmatprep.subr.mxu0 %v315
      %373 = vmatpush2.msra.mxu0 %v314
      %374 = vmatprep.subr.mxu0 %v313
      %375 = vmatpush2.msra.mxu0 %v312
      %376 = vmatprep.subr.mxu0 %v311
      %377 = vmatpush2.msra.mxu0 %v310
      %378 = vmatprep.subr.mxu0 %v309
      %379 = vmatpush2.msra.mxu0 %v308
      %380 = vmatprep.subr.mxu0 %v307
      %381 = vmatpush2.msra.mxu0 %v306
      %382 = vmatprep.subr.mxu0 %v305
      %383 = vmatpush2.msra.mxu0 %v304
      %384 = vmatprep.subr.mxu0 %v303
      %385 = vmatpush2.msra.mxu0 %v302
      %386 = vmatprep.subr.mxu0 %v301
      %387 = vmatpush2.msra.mxu0 %v300
      %388 = vmatprep.subr.mxu0 %v299
      %389 = vmatpush2.msra.mxu0 %v298
      %390 = vmatprep.subr.mxu0 %v297
      %391 = vmatpush2.msra.mxu0 %v296
      %392 = vmatprep.subr.mxu0 %v295
      %393 = vmatpush2.msra.mxu0 %v294
      %394 = vmatprep.subr.mxu0 %v293
      %395 = vmatpush2.msra.mxu0 %v292
      %396 = vmatprep.mubr.f32.mxu0 %v329
      %397 = vmatmul.mubr.f32.gmra.mxu0 %v328
      %v398 = vpop.f32.mrf.mxu0
      %v399 = vadd.f32 0.0, %v398
      %v400 = vpop.f32.mrf.mxu0
      %v401 = vadd.f32 0.0, %v400
      %402 = vmatprep.mubr.f32.mxu0 %v331
      %403 = vmatmul.mubr.f32.gmra.mxu0 %v330
      %v404 = vpop.f32.mrf.mxu0
      %v405 = vadd.f32 0.0, %v404
      %v406 = vpop.f32.mrf.mxu0
      %v407 = vadd.f32 0.0, %v406
      %408 = vdwg.mxu0
      %v409 = vadd.f32 %v324, %v399
      %v410 = vadd.f32 %v325, %v401
      %v411 = vadd.f32 %v326, %v405
      %v412 = vadd.f32 %v327, %v407
      %413 = vst [vmem:[#allocation2] sm:$0xff] %v409
      %414 = vst [vmem:[#allocation2 + $0x8] sm:$0xff] %v410
      %415 = vst [vmem:[#allocation2 + $0x10] sm:$0xff] %v411
      %416 = vst [vmem:[#allocation2 + $0x18] sm:$0xff] %v412
    $region25: #{tpu_custom_call.1} parent=1 // pred_fallthru
      _
    %p417 = pneg %p57
    // Predicated region
    $region26: #{tpu_custom_call.1} parent=1 // pred_check
      _
    $region27: #{tpu_custom_call.1} parent=1 // pred_check_branch
      %419 = sbr.rel (%p57) target = $region29
    $region28: #{tpu_custom_call.1} parent=1 // pred_region
      %v420 = vld [vmem:[#allocation2] sm:$0xff]
      %v421 = vld [vmem:[#allocation2 + $0x8] sm:$0xff]
      %v422 = vld [vmem:[#allocation2 + $0x10] sm:$0xff]
      %v423 = vld [vmem:[#allocation2 + $0x18] sm:$0xff]
      %v424 = vld [vmem:[#allocation3] sm:$0xff]
      %v425 = vld [vmem:[#allocation3 + $0x8] sm:$0xff]
      %v426 = vld [vmem:[#allocation3 + $0x10] sm:$0xff]
      %v427 = vld [vmem:[#allocation3 + $0x18] sm:$0xff]
      %v428 = vld [vmem:[#allocation6] sm:$0xff]
      %v429 = vld [vmem:[#allocation6 + $0x8] sm:$0xff]
      %v430 = vld [vmem:[#allocation6 + $0x10] sm:$0xff]
      %v431 = vld [vmem:[#allocation6 + $0x18] sm:$0xff]
      %v432 = vld [vmem:[#allocation6 + $0x20] sm:$0xff]
      %v433 = vld [vmem:[#allocation6 + $0x28] sm:$0xff]
      %v434 = vld [vmem:[#allocation6 + $0x30] sm:$0xff]
      %v435 = vld [vmem:[#allocation6 + $0x38] sm:$0xff]
      %v436 = vld [vmem:[#allocation6 + $0x40] sm:$0xff]
      %v437 = vld [vmem:[#allocation6 + $0x48] sm:$0xff]
      %v438 = vld [vmem:[#allocation6 + $0x50] sm:$0xff]
      %v439 = vld [vmem:[#allocation6 + $0x58] sm:$0xff]
      %v440 = vld [vmem:[#allocation6 + $0x60] sm:$0xff]
      %v441 = vld [vmem:[#allocation6 + $0x68] sm:$0xff]
      %v442 = vld [vmem:[#allocation6 + $0x70] sm:$0xff]
      %v443 = vld [vmem:[#allocation6 + $0x78] sm:$0xff]
      %v444 = vld [vmem:[#allocation6 + $0x80] sm:$0xff]
      %v445 = vld [vmem:[#allocation6 + $0x88] sm:$0xff]
      %v446 = vld [vmem:[#allocation6 + $0x90] sm:$0xff]
      %v447 = vld [vmem:[#allocation6 + $0x98] sm:$0xff]
      %v448 = vld [vmem:[#allocation6 + $0xa0] sm:$0xff]
      %v449 = vld [vmem:[#allocation6 + $0xa8] sm:$0xff]
      %v450 = vld [vmem:[#allocation6 + $0xb0] sm:$0xff]
      %v451 = vld [vmem:[#allocation6 + $0xb8] sm:$0xff]
      %v452 = vld [vmem:[#allocation6 + $0xc0] sm:$0xff]
      %v453 = vld [vmem:[#allocation6 + $0xc8] sm:$0xff]
      %v454 = vld [vmem:[#allocation6 + $0xd0] sm:$0xff]
      %v455 = vld [vmem:[#allocation6 + $0xd8] sm:$0xff]
      %v456 = vld [vmem:[#allocation6 + $0xe0] sm:$0xff]
      %v457 = vld [vmem:[#allocation6 + $0xe8] sm:$0xff]
      %v458 = vld [vmem:[#allocation6 + $0xf0] sm:$0xff]
      %v459 = vld [vmem:[#allocation6 + $0xf8] sm:$0xff]
      %v460 = vld [vmem:[#allocation6 + $0x100] sm:$0xff]
      %v461 = vld [vmem:[#allocation6 + $0x108] sm:$0xff]
      %v462 = vld [vmem:[#allocation6 + $0x110] sm:$0xff]
      %v463 = vld [vmem:[#allocation6 + $0x118] sm:$0xff]
      %v464 = vld [vmem:[#allocation6 + $0x120] sm:$0xff]
      %v465 = vld [vmem:[#allocation6 + $0x128] sm:$0xff]
      %v466 = vld [vmem:[#allocation6 + $0x130] sm:$0xff]
      %v467 = vld [vmem:[#allocation6 + $0x138] sm:$0xff]
      %v468 = vld [vmem:[#allocation6 + $0x140] sm:$0xff]
      %v469 = vld [vmem:[#allocation6 + $0x148] sm:$0xff]
      %v470 = vld [vmem:[#allocation6 + $0x150] sm:$0xff]
      %v471 = vld [vmem:[#allocation6 + $0x158] sm:$0xff]
      %v472 = vld [vmem:[#allocation6 + $0x160] sm:$0xff]
      %v473 = vld [vmem:[#allocation6 + $0x168] sm:$0xff]
      %v474 = vld [vmem:[#allocation6 + $0x170] sm:$0xff]
      %v475 = vld [vmem:[#allocation6 + $0x178] sm:$0xff]
      %v476 = vld [vmem:[#allocation6 + $0x180] sm:$0xff]
      %v477 = vld [vmem:[#allocation6 + $0x188] sm:$0xff]
      %v478 = vld [vmem:[#allocation6 + $0x190] sm:$0xff]
      %v479 = vld [vmem:[#allocation6 + $0x198] sm:$0xff]
      %v480 = vld [vmem:[#allocation6 + $0x1a0] sm:$0xff]
      %v481 = vld [vmem:[#allocation6 + $0x1a8] sm:$0xff]
      %v482 = vld [vmem:[#allocation6 + $0x1b0] sm:$0xff]
      %v483 = vld [vmem:[#allocation6 + $0x1b8] sm:$0xff]
      %v484 = vld [vmem:[#allocation6 + $0x1c0] sm:$0xff]
      %v485 = vld [vmem:[#allocation6 + $0x1c8] sm:$0xff]
      %v486 = vld [vmem:[#allocation6 + $0x1d0] sm:$0xff]
      %v487 = vld [vmem:[#allocation6 + $0x1d8] sm:$0xff]
      %v488 = vld [vmem:[#allocation6 + $0x1e0] sm:$0xff]
      %v489 = vld [vmem:[#allocation6 + $0x1e8] sm:$0xff]
      %v490 = vld [vmem:[#allocation6 + $0x1f0] sm:$0xff]
      %v491 = vld [vmem:[#allocation6 + $0x1f8] sm:$0xff]
      %492 = vmatprep.subr.mxu0 %v459
      %493 = vmatpush1.msra.mxu0 %v458
      %494 = vmatprep.subr.mxu0 %v457
      %495 = vmatpush1.msra.mxu0 %v456
      %496 = vmatprep.subr.mxu0 %v455
      %497 = vmatpush1.msra.mxu0 %v454
      %498 = vmatprep.subr.mxu0 %v453
      %499 = vmatpush1.msra.mxu0 %v452
      %500 = vmatprep.subr.mxu0 %v451
      %501 = vmatpush1.msra.mxu0 %v450
      %502 = vmatprep.subr.mxu0 %v449
      %503 = vmatpush1.msra.mxu0 %v448
      %504 = vmatprep.subr.mxu0 %v447
      %505 = vmatpush1.msra.mxu0 %v446
      %506 = vmatprep.subr.mxu0 %v445
      %507 = vmatpush1.msra.mxu0 %v444
      %508 = vmatprep.subr.mxu0 %v443
      %509 = vmatpush1.msra.mxu0 %v442
      %510 = vmatprep.subr.mxu0 %v441
      %511 = vmatpush1.msra.mxu0 %v440
      %512 = vmatprep.subr.mxu0 %v439
      %513 = vmatpush1.msra.mxu0 %v438
      %514 = vmatprep.subr.mxu0 %v437
      %515 = vmatpush1.msra.mxu0 %v436
      %516 = vmatprep.subr.mxu0 %v435
      %517 = vmatpush1.msra.mxu0 %v434
      %518 = vmatprep.subr.mxu0 %v433
      %519 = vmatpush1.msra.mxu0 %v432
      %520 = vmatprep.subr.mxu0 %v431
      %521 = vmatpush1.msra.mxu0 %v430
      %522 = vmatprep.subr.mxu0 %v429
      %523 = vmatpush1.msra.mxu0 %v428
      %524 = vmatprep.subr.mxu0 %v491
      %525 = vmatpush2.msra.mxu0 %v490
      %526 = vmatprep.subr.mxu0 %v489
      %527 = vmatpush2.msra.mxu0 %v488
      %528 = vmatprep.subr.mxu0 %v487
      %529 = vmatpush2.msra.mxu0 %v486
      %530 = vmatprep.subr.mxu0 %v485
      %531 = vmatpush2.msra.mxu0 %v484
      %532 = vmatprep.subr.mxu0 %v483
      %533 = vmatpush2.msra.mxu0 %v482
      %534 = vmatprep.subr.mxu0 %v481
      %535 = vmatpush2.msra.mxu0 %v480
      %536 = vmatprep.subr.mxu0 %v479
      %537 = vmatpush2.msra.mxu0 %v478
      %538 = vmatprep.subr.mxu0 %v477
      %539 = vmatpush2.msra.mxu0 %v476
      %540 = vmatprep.subr.mxu0 %v475
      %541 = vmatpush2.msra.mxu0 %v474
      %542 = vmatprep.subr.mxu0 %v473
      %543 = vmatpush2.msra.mxu0 %v472
      %544 = vmatprep.subr.mxu0 %v471
      %545 = vmatpush2.msra.mxu0 %v470
      %546 = vmatprep.subr.mxu0 %v469
      %547 = vmatpush2.msra.mxu0 %v468
      %548 = vmatprep.subr.mxu0 %v467
      %549 = vmatpush2.msra.mxu0 %v466
      %550 = vmatprep.subr.mxu0 %v465
      %551 = vmatpush2.msra.mxu0 %v464
      %552 = vmatprep.subr.mxu0 %v463
      %553 = vmatpush2.msra.mxu0 %v462
      %554 = vmatprep.subr.mxu0 %v461
      %555 = vmatpush2.msra.mxu0 %v460
      %556 = vmatprep.mubr.f32.mxu0 %v425
      %557 = vmatmul.mubr.f32.gmra.mxu0 %v424
      %v558 = vpop.f32.mrf.mxu0
      %v559 = vadd.f32 0.0, %v558
      %v560 = vpop.f32.mrf.mxu0
      %v561 = vadd.f32 0.0, %v560
      %562 = vmatprep.mubr.f32.mxu0 %v427
      %563 = vmatmul.mubr.f32.gmra.mxu0 %v426
      %v564 = vpop.f32.mrf.mxu0
      %v565 = vadd.f32 0.0, %v564
      %v566 = vpop.f32.mrf.mxu0
      %v567 = vadd.f32 0.0, %v566
      %568 = vdwg.mxu0
      %v569 = vadd.f32 %v420, %v559
      %v570 = vadd.f32 %v421, %v561
      %v571 = vadd.f32 %v422, %v565
      %v572 = vadd.f32 %v423, %v567
      %573 = vst [vmem:[#allocation2] sm:$0xff] %v569
      %574 = vst [vmem:[#allocation2 + $0x8] sm:$0xff] %v570
      %575 = vst [vmem:[#allocation2 + $0x10] sm:$0xff] %v571
      %576 = vst [vmem:[#allocation2 + $0x18] sm:$0xff] %v572
    $region29: #{tpu_custom_call.1} parent=1 // pred_fallthru
      _
    // Predicated region
    $region30: #{tpu_custom_call.1} parent=1 // pred_check
      %p577 = pneg %p40
    $region31: #{tpu_custom_call.1} parent=1 // pred_check_branch
      %579 = sbr.rel (%p577) target = $region33
    $region32: #{tpu_custom_call.1} parent=1 // pred_region
      %v580 = vld [vmem:[#allocation2] sm:$0xff]
      %v581 = vld [vmem:[#allocation2 + $0x8] sm:$0xff]
      %v582 = vld [vmem:[#allocation2 + $0x10] sm:$0xff]
      %v583 = vld [vmem:[#allocation2 + $0x18] sm:$0xff]
      %v584 = vsub.f32 %v580, 4.0
      %v585 = vsub.f32 %v581, 4.0
      %v586 = vsub.f32 %v582, 4.0
      %v587 = vsub.f32 %v583, 4.0
      %588 = vst [vmem:[#allocation8] sm:$0xff] %v584
      %589 = vst [vmem:[#allocation8 + $0x8] sm:$0xff] %v585
      %590 = vst [vmem:[#allocation8 + $0x10] sm:$0xff] %v586
      %591 = vst [vmem:[#allocation8 + $0x18] sm:$0xff] %v587
    $region33: #{tpu_custom_call.1} parent=1 // pred_fallthru
      _
    // Predicated region
    $region34: #{tpu_custom_call.1} parent=1 // pred_check
      _
    $region35: #{tpu_custom_call.1} parent=1 // pred_check_branch
      %593 = sbr.rel (0) target = $region37
    $region36: #{tpu_custom_call.1} parent=1 // pred_region
      %s595 = ssub.s32 512, 512
      %596 = vsyncadd [#allocation5], %s595
      %s597 = sshll.u32 [#allocation8], 4
      %s598 = int_to_ptr.vmem [resolvable:$true] %s597
      %603 = dma.vmem_to_hbm [thread:$0]  %s598, 512, %s2, [#allocation5], 256, 256, 16
    $region37: #{tpu_custom_call.1} parent=1 // pred_fallthru
      _
    // Predicated region
    $region38: #{tpu_custom_call.1} parent=1 // pred_check
      _
    $region39: #{tpu_custom_call.1} parent=1 // pred_check_branch
      %605 = sbr.rel (0) target = $region41
    $region40: #{tpu_custom_call.1} parent=1 // pred_region
      %606 = dma.done [#allocation5], 512
    $region41: #{tpu_custom_call.1} parent=1 // pred_fallthru
      _
    %607 = vsyncpa [#allocation4], 1
    %608 = vsyncpa [#allocation7], 1
    %609 = vsyncpa [#allocation5], 1

</llo_original>
